<compile_context>
chip_gen: v7x
topology: tpu7x:2x2x1
jax: 0.10.0
libtpu: 0.0.40
codegen_flags: <defaults>
</compile_context>

<pallas_src>
import functools

import jax
import jax.numpy as jnp
from jax import lax
from jax.experimental import pallas as pl
from jax.experimental.pallas import tpu as pltpu


def _ce_kernel(x_ref, tgt_ref, out_ref, m_sc, l_sc, xt_sc, *, n_total, c_total):
    """Process one (TILE_N, TILE_C) logits chunk of the online log-sum-exp."""
    i = pl.program_id(0)            # row-tile index ("parallel")
    j = pl.program_id(1)            # class-chunk index ("arbitrary", sequential)
    tile_n, tile_c = x_ref.shape

    @pl.when(j == 0)
    def _():
        m_sc[...] = jnp.full_like(m_sc, -jnp.inf)   # running max
        l_sc[...] = jnp.zeros_like(l_sc)            # running sum(exp(x - m))
        xt_sc[...] = jnp.zeros_like(xt_sc)          # running x[target]

    x = x_ref[...]                                  # native dtype; no eager f32 pass
    col_ids = j * tile_c + lax.broadcasted_iota(jnp.int32, (tile_n, tile_c), 1)

    # x[target]: where-select + reduce in the native dtype (at most one nonzero
    # per row, so the reduce is exact); only a tiny (TILE_N, 1) cast afterwards.
    # TODO(synk): no ignore_index=-100 handling (PyTorch default); callers must
    #             pass valid class ids, as the reference module does.
    xt_sc[...] += jnp.sum(
        jnp.where(col_ids == tgt_ref[...], x, jnp.zeros_like(x)),
        axis=1, keepdims=True,
    ).astype(jnp.float32)

    # Online log-sum-exp in f32; the upcast is fused into this expression.
    if c_total % tile_c == 0:
        x32 = x.astype(jnp.float32)
    else:  # ragged last class chunk: mask padded columns out of max / exp
        x32 = jnp.where(col_ids < c_total, x.astype(jnp.float32), -jnp.inf)
    m_new = jnp.maximum(m_sc[...], jnp.max(x32, axis=1, keepdims=True))
    alpha = jnp.exp(m_sc[...] - m_new)
    l_sc[...] = alpha * l_sc[...] + jnp.sum(jnp.exp(x32 - m_new),
                                            axis=1, keepdims=True)
    m_sc[...] = m_new

    @pl.when(j == pl.num_programs(1) - 1)
    def _():
        # -log_softmax(x)[target] = log(sum exp(x - m)) + m - x[target]
        row_loss = jnp.log(l_sc[...]) + m_sc[...] - xt_sc[...]
        if n_total % tile_n != 0:   # ragged last row tile: zero padded rows
            row_ids = i * tile_n + lax.broadcasted_iota(jnp.int32, (tile_n, 1), 0)
            row_loss = jnp.where(row_ids < n_total, row_loss, 0.0)
        out_ref[...] = row_loss


def _vmem_limit_bytes():
    """Generation-aware scoped-VMEM limit (~75% of capacity, capped at 64 MiB)."""
    cap = None
    try:
        cap = getattr(pltpu.get_tpu_info(), "vmem_capacity_bytes", None)
    except Exception:
        cap = None
    if cap is None:
        return 48 * 1024 * 1024            # safe everywhere (v7x has 64 MiB physical)
    return min(64 * 1024 * 1024, (int(cap) * 3) // 4)


def _choose_tiles(n, c, in_itemsize, vmem_limit):
    # Per-element cost: double-buffered input (2*itemsize) + ~16 B of in-kernel
    # f32/i32 temporaries (iota, where/exp operands). Per-row fixed cost: the
    # lane-padded (TILE_N, 1) target/output blocks and f32 scratch (~4 KiB/row).
    bytes_per_elem = 2 * in_itemsize + 16
    row_fixed = 4096
    budget = (vmem_limit * 3) // 5          # headroom for compiler-internal scratch

    # Sublane packing granularity of the logits dtype.
    if in_itemsize >= 4:
        row_align = 8
    elif in_itemsize == 2:
        row_align = 16
    else:
        row_align = 32

    min_rows = max(row_align, 256)
    if c * bytes_per_elem + row_fixed <= budget // min_rows:
        tile_c = c                          # single class chunk
    else:                                   # vocab-scale C: chunk the class axis
        cand = (budget // min_rows - row_fixed) // bytes_per_elem
        cand = max(512, (cand // 128) * 128)
        tile_c = min(cand, (c // 128) * 128) if c >= 128 else c

    tile_n = budget // (tile_c * bytes_per_elem + row_fixed)
    tile_n = max(row_align, min(tile_n, 8192))
    if tile_n >= n:
        tile_n = n                          # whole batch in one row tile
    else:
        tile_n = (tile_n // row_align) * row_align
    return tile_n, tile_c


def cross_entropy_loss(logits, targets):
    """Pallas cross-entropy (mean reduction), matching nn.CrossEntropyLoss().

    logits:  (N, C) float logits (f32 or bf16)
    targets: (N,)   integer class ids
    returns scalar float32 loss
    """
    n, c = logits.shape
    vmem_limit = _vmem_limit_bytes()
    tile_n, tile_c = _choose_tiles(n, c, jnp.dtype(logits.dtype).itemsize, vmem_limit)

    tgt = targets.astype(jnp.int32).reshape(n, 1)
    kernel = functools.partial(_ce_kernel, n_total=n, c_total=c)

    per_row = pl.pallas_call(
        kernel,
        out_shape=jax.ShapeDtypeStruct((n, 1), jnp.float32),
        grid=(pl.cdiv(n, tile_n), pl.cdiv(c, tile_c)),
        in_specs=[
            pl.BlockSpec((tile_n, tile_c), lambda i, j: (i, j)),   # logits chunk
            pl.BlockSpec((tile_n, 1), lambda i, j: (i, 0)),        # targets
        ],
        out_specs=pl.BlockSpec((tile_n, 1), lambda i, j: (i, 0)),  # per-row losses
        scratch_shapes=[
            pltpu.VMEM((tile_n, 1), jnp.float32),   # running max
            pltpu.VMEM((tile_n, 1), jnp.float32),   # running sum-exp
            pltpu.VMEM((tile_n, 1), jnp.float32),   # running x[target]
        ],
        compiler_params=pltpu.CompilerParams(
            dimension_semantics=("parallel", "arbitrary"),
            vmem_limit_bytes=vmem_limit,
        ),
    )(logits, tgt)

    # Tiny final reduction in the wrapper (also avoids the precision loss of a
    # single sequentially-accumulated f32 scalar for very large N).
    return jnp.sum(per_row) / jnp.float32(n)


def _ce_ref(logits, targets):
    """Pure-JAX reference mirroring nn.CrossEntropyLoss (mean reduction)."""
    logp = jax.nn.log_softmax(logits.astype(jnp.float32), axis=1)
    n = logits.shape[0]
    return -jnp.mean(logp[jnp.arange(n), targets])


if __name__ == "__main__":
    key = jax.random.PRNGKey(0)
    k1, k2 = jax.random.split(key)

    N, C = 8, 16  # batch_size, num_classes
    logits = jax.random.normal(k1, (N, C), dtype=jnp.float32)
    targets = jax.random.randint(k2, (N,), 0, C, dtype=jnp.int32)

    loss = cross_entropy_loss(logits, targets)
    loss = jax.block_until_ready(loss)

    ref = _ce_ref(logits, targets)
    assert jnp.allclose(loss, ref, rtol=1e-5, atol=1e-6), (loss, ref)

    print("KERNEL_OK")
</pallas_src>

<mosaic_0001>
module attributes {stable_mosaic.version = 11 : i64} {
  func.func @_ce_kernel(%arg0: i32, %arg1: i32, %arg2: memref<8x16xf32, #tpu.memory_space<vmem>>, %arg3: memref<8x1xi32, #tpu.memory_space<vmem>>, %arg4: memref<8x1xf32, #tpu.memory_space<vmem>>, %arg5: memref<8x1xf32, #tpu.memory_space<vmem>>, %arg6: memref<8x1xf32, #tpu.memory_space<vmem>>, %arg7: memref<8x1xf32, #tpu.memory_space<vmem>>) attributes {dimension_semantics = [#tpu.dimension_semantics<parallel>, #tpu.dimension_semantics<arbitrary>], iteration_bounds = array<i64: 1, 1>, scalar_prefetch = 0 : i64, scratch_operands = 3 : i64, tpu.core_type = #tpu.core_type<tc>, window_params = [{transform_indices = @transform_0, window_bounds = array<i64: 8, 16>}, {transform_indices = @transform_1, window_bounds = array<i64: 8, 1>}, {transform_indices = @transform_2, window_bounds = array<i64: 8, 1>}]} {
    %c0_i32 = arith.constant 0 : i32
    %0 = arith.cmpi eq, %arg1, %c0_i32 : i32
    %1 = arith.extui %0 : i1 to i32
    %c0_i32_0 = arith.constant 0 : i32
    %2 = arith.cmpi ne, %1, %c0_i32_0 : i32
    scf.if %2 {
      %cst_23 = arith.constant 0xFF800000 : f32
      %38 = vector.broadcast %cst_23 : f32 to vector<8x1xf32>
      %c0_24 = arith.constant 0 : index
      %c0_25 = arith.constant 0 : index
      %39 = vector.load %arg5[%c0_24, %c0_25] : memref<8x1xf32, #tpu.memory_space<vmem>>, vector<8x1xf32>
      tpu.vector_store %arg5[%c0_24, %c0_25], %38 {strides = array<i32>} : memref<8x1xf32, #tpu.memory_space<vmem>>, vector<8x1xf32>,
      %cst_26 = arith.constant 0.000000e+00 : f32
      %40 = vector.broadcast %cst_26 : f32 to vector<8x1xf32>
      %c0_27 = arith.constant 0 : index
      %c0_28 = arith.constant 0 : index
      %41 = vector.load %arg6[%c0_27, %c0_28] : memref<8x1xf32, #tpu.memory_space<vmem>>, vector<8x1xf32>
      tpu.vector_store %arg6[%c0_27, %c0_28], %40 {strides = array<i32>} : memref<8x1xf32, #tpu.memory_space<vmem>>, vector<8x1xf32>,
      %cst_29 = arith.constant 0.000000e+00 : f32
      %42 = vector.broadcast %cst_29 : f32 to vector<8x1xf32>
      %c0_30 = arith.constant 0 : index
      %c0_31 = arith.constant 0 : index
      %43 = vector.load %arg7[%c0_30, %c0_31] : memref<8x1xf32, #tpu.memory_space<vmem>>, vector<8x1xf32>
      tpu.vector_store %arg7[%c0_30, %c0_31], %42 {strides = array<i32>} : memref<8x1xf32, #tpu.memory_space<vmem>>, vector<8x1xf32>,
    } else {
    }
    %c0 = arith.constant 0 : index
    %c0_1 = arith.constant 0 : index
    %3 = vector.load %arg2[%c0, %c0_1] : memref<8x16xf32, #tpu.memory_space<vmem>>, vector<8x16xf32>
    %c16_i32 = arith.constant 16 : i32
    %4 = arith.muli %arg1, %c16_i32 : i32
    %5 = tpu.iota {dimensions = array<i32: 1>} : vector<8x16xi32>
    %6 = vector.broadcast %4 : i32 to vector<8x16xi32>
    %7 = arith.addi %6, %5 : vector<8x16xi32>
    %c0_2 = arith.constant 0 : index
    %c0_3 = arith.constant 0 : index
    %8 = vector.load %arg7[%c0_2, %c0_3] : memref<8x1xf32, #tpu.memory_space<vmem>>, vector<8x1xf32>
    %c0_4 = arith.constant 0 : index
    %c0_5 = arith.constant 0 : index
    %9 = vector.load %arg3[%c0_4, %c0_5] : memref<8x1xi32, #tpu.memory_space<vmem>>, vector<8x1xi32>
    %10 = vector.broadcast %9 : vector<8x1xi32> to vector<8x16xi32>
    %11 = arith.cmpi eq, %7, %10 : vector<8x16xi32>
    %cst = arith.constant 0.000000e+00 : f32
    %12 = vector.broadcast %cst : f32 to vector<8x16xf32>
    %13 = arith.select %11, %3, %12 : vector<8x16xi1>, vector<8x16xf32>
    %cst_6 = arith.constant dense<0.000000e+00> : vector<8xf32>
    %14 = vector.multi_reduction <add>, %13, %cst_6 [1] : vector<8x16xf32> to vector<8xf32>
    %15 = vector.shape_cast %14 : vector<8xf32> to vector<8x1xf32>
    %16 = arith.addf %8, %15 : vector<8x1xf32>
    %c0_7 = arith.constant 0 : index
    %c0_8 = arith.constant 0 : index
    %17 = vector.load %arg7[%c0_7, %c0_8] : memref<8x1xf32, #tpu.memory_space<vmem>>, vector<8x1xf32>
    tpu.vector_store %arg7[%c0_7, %c0_8], %16 {strides = array<i32>} : memref<8x1xf32, #tpu.memory_space<vmem>>, vector<8x1xf32>,
    %c0_9 = arith.constant 0 : index
    %c0_10 = arith.constant 0 : index
    %18 = vector.load %arg5[%c0_9, %c0_10] : memref<8x1xf32, #tpu.memory_space<vmem>>, vector<8x1xf32>
    %cst_11 = arith.constant dense<0xFF800000> : vector<8xf32>
    %19 = vector.multi_reduction <maximumf>, %3, %cst_11 [1] : vector<8x16xf32> to vector<8xf32>
    %20 = vector.shape_cast %19 : vector<8xf32> to vector<8x1xf32>
    %21 = arith.maximumf %18, %20 : vector<8x1xf32>
    %c0_12 = arith.constant 0 : index
    %c0_13 = arith.constant 0 : index
    %22 = vector.load %arg5[%c0_12, %c0_13] : memref<8x1xf32, #tpu.memory_space<vmem>>, vector<8x1xf32>
    %23 = arith.subf %22, %21 : vector<8x1xf32>
    %24 = math.exp %23 : vector<8x1xf32>
    %c0_14 = arith.constant 0 : index
    %c0_15 = arith.constant 0 : index
    %25 = vector.load %arg6[%c0_14, %c0_15] : memref<8x1xf32, #tpu.memory_space<vmem>>, vector<8x1xf32>
    %26 = arith.mulf %24, %25 : vector<8x1xf32>
    %27 = vector.broadcast %21 : vector<8x1xf32> to vector<8x16xf32>
    %28 = arith.subf %3, %27 : vector<8x16xf32>
    %29 = math.exp %28 : vector<8x16xf32>
    %cst_16 = arith.constant dense<0.000000e+00> : vector<8xf32>
    %30 = vector.multi_reduction <add>, %29, %cst_16 [1] : vector<8x16xf32> to vector<8xf32>
    %31 = vector.shape_cast %30 : vector<8xf32> to vector<8x1xf32>
    %32 = arith.addf %26, %31 : vector<8x1xf32>
    %c0_17 = arith.constant 0 : index
    %c0_18 = arith.constant 0 : index
    %33 = vector.load %arg6[%c0_17, %c0_18] : memref<8x1xf32, #tpu.memory_space<vmem>>, vector<8x1xf32>
    tpu.vector_store %arg6[%c0_17, %c0_18], %32 {strides = array<i32>} : memref<8x1xf32, #tpu.memory_space<vmem>>, vector<8x1xf32>,
    %c0_19 = arith.constant 0 : index
    %c0_20 = arith.constant 0 : index
    %34 = vector.load %arg5[%c0_19, %c0_20] : memref<8x1xf32, #tpu.memory_space<vmem>>, vector<8x1xf32>
    tpu.vector_store %arg5[%c0_19, %c0_20], %21 {strides = array<i32>} : memref<8x1xf32, #tpu.memory_space<vmem>>, vector<8x1xf32>,
    %c0_i32_21 = arith.constant 0 : i32
    %35 = arith.cmpi eq, %arg1, %c0_i32_21 : i32
    %36 = arith.extui %35 : i1 to i32
    %c0_i32_22 = arith.constant 0 : i32
    %37 = arith.cmpi ne, %36, %c0_i32_22 : i32
    scf.if %37 {
      %c0_23 = arith.constant 0 : index
      %c0_24 = arith.constant 0 : index
      %38 = vector.load %arg6[%c0_23, %c0_24] : memref<8x1xf32, #tpu.memory_space<vmem>>, vector<8x1xf32>
      %39 = math.log %38 : vector<8x1xf32>
      %c0_25 = arith.constant 0 : index
      %c0_26 = arith.constant 0 : index
      %40 = vector.load %arg5[%c0_25, %c0_26] : memref<8x1xf32, #tpu.memory_space<vmem>>, vector<8x1xf32>
      %41 = arith.addf %39, %40 : vector<8x1xf32>
      %c0_27 = arith.constant 0 : index
      %c0_28 = arith.constant 0 : index
      %42 = vector.load %arg7[%c0_27, %c0_28] : memref<8x1xf32, #tpu.memory_space<vmem>>, vector<8x1xf32>
      %43 = arith.subf %41, %42 : vector<8x1xf32>
      %c0_29 = arith.constant 0 : index
      %c0_30 = arith.constant 0 : index
      %44 = vector.load %arg4[%c0_29, %c0_30] : memref<8x1xf32, #tpu.memory_space<vmem>>, vector<8x1xf32>
      tpu.vector_store %arg4[%c0_29, %c0_30], %43 {strides = array<i32>} : memref<8x1xf32, #tpu.memory_space<vmem>>, vector<8x1xf32>,
    } else {
    }
    return
  }
  func.func @transform_0(%arg0: i32, %arg1: i32) -> (i32, i32) {
    %c0_i32 = arith.constant 0 : i32
    return %arg0, %arg1 : i32, i32
  }
  func.func @transform_1(%arg0: i32, %arg1: i32) -> (i32, i32) {
    %c0_i32 = arith.constant 0 : i32
    %c0_i32_0 = arith.constant 0 : i32
    return %arg0, %c0_i32 : i32, i32
  }
  func.func @transform_2(%arg0: i32, %arg1: i32) -> (i32, i32) {
    %c0_i32 = arith.constant 0 : i32
    %c0_i32_0 = arith.constant 0 : i32
    return %arg0, %c0_i32 : i32, i32
  }
}

</mosaic_0001>

<llo_original>
// kernel: tpu_custom_call.1
$region0: #{tpu_custom_call.1}
  #allocation0 [shape = 'u32[]', space=smem, size = 0x4, offset = 0x4, fixed_abs, tag = 'smem constant byte address 0x4 - core index']
  #allocation1 [shape = 'u32[144,128]{1,0:T(1,128)}', space=vmem, size = 0x12000, scoped, tag = 'internal scratch']
  #allocation2 [shape = 'f32[8,1]{1,0:T(8,128)}', space=vmem, size = 0x1000, scoped, tag = 'scratch operand']
  #allocation3 [shape = 'f32[8,1]{1,0:T(8,128)}', space=vmem, size = 0x1000, scoped, tag = 'scratch operand']
  #allocation4 [shape = 'f32[8,1]{1,0:T(8,128)}', space=vmem, size = 0x1000, scoped, tag = 'scratch operand']
  %s0 = inlined_call_operand.vmem [shape: f32[8,16], index: 0, kind: input, shape index: {}]
  %s1 = inlined_call_operand.vmem [shape: s32[8,1], index: 1, kind: input, shape index: {}]
  %s2 = inlined_call_operand.vmem [shape: f32[8,1], index: 2, kind: output, shape index: {}]
  %s3 = sld [smem:[#allocation0]]
  $region26: #{tpu_custom_call.1} parent=0
    _
  %s5 = ssub.s32 1, %s3
  %s6 = scalar_select 0, %s5, %s3
  // Predicated region
  $region2: #{tpu_custom_call.1} parent=0 // pred_check
    _
  $region3: #{tpu_custom_call.1} parent=0 // pred_check_branch
    %8 = sbr.rel (0) target = $region5
  $region4: #{tpu_custom_call.1} parent=0 // pred_region
    _
  $region5: #{tpu_custom_call.1} parent=0 // pred_fallthru
    _
  // Predicated region
  $region6: #{tpu_custom_call.1} parent=0 // pred_check
    _
  $region7: #{tpu_custom_call.1} parent=0 // pred_check_branch
    %10 = sbr.rel (0) target = $region9
  $region8: #{tpu_custom_call.1} parent=0 // pred_region
    _
  $region9: #{tpu_custom_call.1} parent=0 // pred_fallthru
    _
  %p11 = scmp.eq.s32.totalorder 0, 0
  // Predicated region
  $region10: #{tpu_custom_call.1} parent=0 // pred_check
    %p12 = pneg %p11
  $region11: #{tpu_custom_call.1} parent=0 // pred_check_branch
    %14 = sbr.rel (%p12) target = $region13
  $region12: #{tpu_custom_call.1} parent=0 // pred_region
    %vm15 = vcmask 7168
    %16 = vst.msk [vmem:[#allocation2] sm:$0xff] %vm15, -inf
    %17 = vst.msk [vmem:[#allocation3] sm:$0xff] %vm15, 0.0
    %18 = vst.msk [vmem:[#allocation4] sm:$0xff] %vm15, 0.0
  $region13: #{tpu_custom_call.1} parent=0 // pred_fallthru
    _
  %v19 = vld [vmem:[%s0] sm:$0xff]
  %s20 = smul.u32 0, 16
  %v21 = vlaneseq
  %v22 = vand.u32 %v21, 127
  %v23 = vstv %s20
  %v24 = vadd.s32 %v23, %v22
  %v25 = vld [vmem:[#allocation4] sm:$0xff]
  %v26 = vld [vmem:[%s1] sm:$0xff]
  %27 = vset.pattern.permute.xlu0 0
  %28 = vperm.xlu0 %27, %v26
  %v29 = vpop.permute.xlu0 %28
  %vm30 = vcmp.eq.s32.totalorder %v24, %v29
  %v31 = vsel %vm30, %v19, 0.0
  %vm32 = vcmask 130048
  %v33 = vsel %vm32, %v31, 0.0
  %34 = vadd.xlane.f32.xlu0 %v33
  %v35 = vpop.xlane.xlu0 %34
  %v36 = vadd.f32 %v25, %v35
  %vm37 = vcmask 7168
  %38 = vst.msk [vmem:[#allocation4] sm:$0xff] %vm37, %v36
  %v39 = vld [vmem:[#allocation2] sm:$0xff]
  %v40 = vsel %vm32, %v19, -inf
  %41 = vmax.xlane.f32.xlu0 %v40
  %v42 = vpop.xlane.xlu0 %41
  %v43 = vmax.f32 %v39, %v42
  %v44 = vsub.f32 %v39, %v43
  %v45 = vmul.f32 %v44, 1.442695
  %v46 = vpow.pop %v45
  %v47 = vld [vmem:[#allocation3] sm:$0xff]
  %v48 = vmul.f32 %v46, %v47
  %50 = vset.pattern.permute.xlu0 0
  %51 = vperm.xlu0 %50, %v43
  %v52 = vpop.permute.xlu0 %51
  %v54 = vsub.f32 %v19, %v52
  %v55 = vmul.f32 %v54, 1.442695
  %v56 = vpow.pop %v55
  %v57 = vsel %vm32, %v56, 0.0
  %58 = vadd.xlane.f32.xlu0 %v57
  %v59 = vpop.xlane.xlu0 %58
  %v60 = vadd.f32 %v48, %v59
  %61 = vst.msk [vmem:[#allocation3] sm:$0xff] %vm37, %v60
  %62 = vst.msk [vmem:[#allocation2] sm:$0xff] %vm37, %v43
  // Predicated region
  $region14: #{tpu_custom_call.1} parent=0 // pred_check
    %p63 = pneg %p11
  $region15: #{tpu_custom_call.1} parent=0 // pred_check_branch
    %65 = sbr.rel (%p63) target = $region17
  $region16: #{tpu_custom_call.1} parent=0 // pred_region
    %v66 = vld [vmem:[#allocation3] sm:$0xff]
    %v67 = vlog2.pop %v66
    %v68 = vmul.f32 %v67, 0.6931472
    %v69 = vld [vmem:[#allocation2] sm:$0xff]
    %v70 = vadd.f32 %v68, %v69
    %v71 = vld [vmem:[#allocation4] sm:$0xff]
    %v72 = vsub.f32 %v70, %v71
    %73 = vst.msk [vmem:[%s2] sm:$0xff] %vm37, %v72
  $region17: #{tpu_custom_call.1} parent=0 // pred_fallthru
    _
  // Predicated region
  $region18: #{tpu_custom_call.1} parent=0 // pred_check
    _
  $region19: #{tpu_custom_call.1} parent=0 // pred_check_branch
    %75 = sbr.rel (0) target = $region21
  $region20: #{tpu_custom_call.1} parent=0 // pred_region
    _
  $region21: #{tpu_custom_call.1} parent=0 // pred_fallthru
    _
  // Predicated region
  $region22: #{tpu_custom_call.1} parent=0 // pred_check
    _
  $region23: #{tpu_custom_call.1} parent=0 // pred_check_branch
    %77 = sbr.rel (0) target = $region25
  $region24: #{tpu_custom_call.1} parent=0 // pred_region
    _
  $region25: #{tpu_custom_call.1} parent=0 // pred_fallthru
    _

</llo_original>
